<compile_context>
chip_gen: v7x
topology: tpu7x:2x2x1
jax: 0.10.0
libtpu: 0.0.40
codegen_flags: <defaults>
</compile_context>

<pallas_src>
import functools
import math

import jax
import jax.numpy as jnp
from jax import lax
from jax.experimental import pallas as pl
from jax.experimental.pallas import tpu as pltpu


def _label_smoothing_kernel(out_ref, tgt_ref, loss_ref, acc_ref, *,
                            confidence, smoothing_value, row_const,
                            padding_idx, vocab_size, block_v, needs_edge_mask):
    """Grid = (B tiles ["parallel"], V tiles ["arbitrary" reduction axis])."""
    k = pl.program_id(1)

    @pl.when(k == 0)
    def _init():
        acc_ref[...] = jnp.zeros_like(acc_ref)

    tgt = tgt_ref[...]                                  # (tb, 1) int32
    tb, tv = out_ref.shape

    # Local (per-tile) column indices; compare against shifted target / padding
    # instead of adding k*block_v to the whole tile.
    cols = lax.broadcasted_iota(jnp.int32, (tb, tv), 1)
    col0 = k * block_v
    is_tgt = cols == (tgt - col0)                       # (tb, tv) via (tb,1) bcast
    is_pad = cols == (padding_idx - col0)               # scalar bcast

    # Smoothed one-hot weights for this tile (rows with tgt == pad fixed later).
    w = jnp.where(is_pad, 0.0, jnp.where(is_tgt, confidence, smoothing_value))
    if needs_edge_mask:                                 # static: only if V % tv != 0
        w = jnp.where(cols < (vocab_size - col0), w, 0.0)

    # Single fused pass: upcast * weight * lane-reduce, accumulated per row.
    acc_ref[...] += jnp.sum(w * out_ref[...].astype(jnp.float32),
                            axis=-1, keepdims=True)

    @pl.when(k == pl.num_programs(1) - 1)
    def _finalize():
        # loss = sum td*out - sum td*log td ; rows with tgt == padding_idx -> 0.
        loss = jnp.where(tgt != padding_idx, acc_ref[...] - row_const, 0.0)
        loss_ref[...] = loss.astype(loss_ref.dtype)


def _vmem_capacity_bytes():
    """Physical per-core VMEM; conservative 64 MiB fallback (v7x floor)."""
    try:
        cap = getattr(pltpu.get_tpu_info(), "vmem_capacity_bytes", None)
        if cap:
            return int(cap)
    except Exception:
        pass
    return 64 << 20


def _pick_tiles(B, V, itemsize, block_budget_bytes):
    """Pick (block_b, block_v).  block_v is V or a multiple of 128; block_b is
    B or a multiple of 8.  A single input block targets block_budget_bytes;
    the wrapper sizes vmem_limit_bytes from the *final* choice, so the small
    overshoot from the min-8-rows clamp stays safe on every generation."""
    row_bytes = V * itemsize
    if V % 128 != 0 or 8 * row_bytes <= block_budget_bytes:
        block_v = V                       # full vocab row per tile
    else:
        block_v = (block_budget_bytes // (8 * itemsize)) // 128 * 128
        block_v = max(128, min(block_v, V))
    tb = block_budget_bytes // (block_v * itemsize)
    if tb >= B:
        tb = B
    else:
        tb = max(8, (tb // 8) * 8)
    return tb, block_v


def _vmem_limit_for(tb, tv, itemsize, capacity):
    """Explicit scoped-VMEM limit: double-buffered input + targets + output +
    accumulator, plus slack for compiler-internal scratch."""
    need = 2 * tb * tv * itemsize + 2 * tb * 4 + 2 * tb * 4 + tb * 4
    limit = max(need + (8 << 20), 32 << 20)
    return int(min(limit, capacity - (2 << 20)))


def label_smoothing_loss(output, target, *, label_smoothing, tgt_vocab_size,
                         padding_idx=0, block_b=None, block_v=None,
                         vmem_limit_bytes=None):
    """output: (B, V) log-probs (any float dtype); target: (B,) int. Returns (B,) f32."""
    assert 0.0 < label_smoothing <= 1.0
    assert tgt_vocab_size > 2, "label smoothing requires tgt_vocab_size > 2"
    B, V = output.shape
    assert V == tgt_vocab_size

    confidence = 1.0 - label_smoothing
    smoothing_value = label_smoothing / (tgt_vocab_size - 2)
    # Compile-time constant: sum_j td[j] * log(td[j]) for a non-padding row.
    log_conf = math.log(confidence) if confidence > 0.0 else 0.0
    log_sv = math.log(smoothing_value) if smoothing_value > 0.0 else 0.0
    row_const = (confidence * log_conf
                 + (tgt_vocab_size - 2) * smoothing_value * log_sv)

    itemsize = jnp.dtype(output.dtype).itemsize
    capacity = _vmem_capacity_bytes()
    # ~12 MiB blocks on v7x (64 MiB VMEM), 16 MiB on v5e/v6e (128 MiB).
    block_budget = min(16 << 20, capacity // 5)
    auto_tb, auto_tv = _pick_tiles(B, V, itemsize, block_budget)

    # Validate / round user-supplied tiles to the (8, 128) constraint.
    if block_b is None:
        tb = auto_tb
    else:
        tb = min(int(block_b), B)
        if tb < B:
            tb = max(8, (tb // 8) * 8)
    if block_v is None:
        tv = auto_tv
    else:
        tv = min(int(block_v), V)
        if tv < V:
            tv = max(128, (tv // 128) * 128)

    if vmem_limit_bytes is None:
        vmem_limit_bytes = _vmem_limit_for(tb, tv, itemsize, capacity)

    grid = (pl.cdiv(B, tb), pl.cdiv(V, tv))
    tgt2d = target.astype(jnp.int32).reshape(B, 1)

    kernel = functools.partial(
        _label_smoothing_kernel,
        confidence=confidence,
        smoothing_value=smoothing_value,
        row_const=row_const,
        padding_idx=padding_idx,
        vocab_size=V,
        block_v=tv,
        needs_edge_mask=(V % tv != 0),
    )

    loss = pl.pallas_call(
        kernel,
        out_shape=jax.ShapeDtypeStruct((B, 1), jnp.float32),
        grid_spec=pltpu.PrefetchScalarGridSpec(
            num_scalar_prefetch=0,
            grid=grid,
            in_specs=[
                pl.BlockSpec((tb, tv), lambda i, k: (i, k)),   # log-prob tiles
                pl.BlockSpec((tb, 1), lambda i, k: (i, 0)),    # targets (reused over k)
            ],
            out_specs=pl.BlockSpec((tb, 1), lambda i, k: (i, 0)),
            scratch_shapes=[pltpu.VMEM((tb, 1), jnp.float32)],  # per-row accumulator
        ),
        compiler_params=pltpu.CompilerParams(
            dimension_semantics=("parallel", "arbitrary"),
            vmem_limit_bytes=vmem_limit_bytes,
        ),
    )(output, tgt2d)
    return loss[:, 0]


def _reference_loss(output, target, *, label_smoothing, tgt_vocab_size,
                    padding_idx=0):
    """Pure-JAX reproduction of the PyTorch forward (per-row loss)."""
    output = output.astype(jnp.float32)
    conf = 1.0 - label_smoothing
    sv = label_smoothing / (tgt_vocab_size - 2)
    one_hot = jnp.full((tgt_vocab_size,), sv, jnp.float32).at[padding_idx].set(0.0)
    td = jnp.tile(one_hot[None, :], (target.shape[0], 1))
    td = td.at[jnp.arange(target.shape[0]), target].set(conf)
    td = jnp.where((target == padding_idx)[:, None], 0.0, td)
    kl = jnp.where(td > 0.0, td * (jnp.log(td) - output), 0.0)
    return -kl.sum(-1)


if __name__ == "__main__":
    key = jax.random.PRNGKey(0)
    B, V = 16, 512
    label_smoothing = 0.1
    padding_idx = 0

    k1, k2 = jax.random.split(key)
    logits = jax.random.normal(k1, (B, V), dtype=jnp.float32)
    output = jax.nn.log_softmax(logits, axis=-1)          # (B, V) log-probs
    target = jax.random.randint(k2, (B,), 0, V, dtype=jnp.int32)
    target = target.at[0].set(padding_idx)                # exercise padding-row mask

    ref = _reference_loss(output, target, label_smoothing=label_smoothing,
                          tgt_vocab_size=V, padding_idx=padding_idx)

    # 1) Auto tile choice (single block at this small size).
    loss = label_smoothing_loss(output, target, label_smoothing=label_smoothing,
                                tgt_vocab_size=V, padding_idx=padding_idx)
    loss = jax.block_until_ready(loss)
    assert loss.shape == (B,)
    assert jnp.allclose(loss, ref, atol=1e-5, rtol=1e-5), (loss, ref)

    # 2) Forced B- and V-tiling to exercise the accumulator / reduction grid.
    loss_t = label_smoothing_loss(output, target, label_smoothing=label_smoothing,
                                  tgt_vocab_size=V, padding_idx=padding_idx,
                                  block_b=8, block_v=128)
    loss_t = jax.block_until_ready(loss_t)
    assert jnp.allclose(loss_t, ref, atol=1e-5, rtol=1e-5), (loss_t, ref)

    # 3) bf16 producer path: kernel reads bf16 tiles directly (no wrapper cast).
    out_bf16 = output.astype(jnp.bfloat16)
    loss_bf = label_smoothing_loss(out_bf16, target, label_smoothing=label_smoothing,
                                   tgt_vocab_size=V, padding_idx=padding_idx)
    loss_bf = jax.block_until_ready(loss_bf)
    ref_bf = _reference_loss(out_bf16, target, label_smoothing=label_smoothing,
                             tgt_vocab_size=V, padding_idx=padding_idx)
    assert jnp.allclose(loss_bf, ref_bf, atol=1e-2, rtol=1e-2), (loss_bf, ref_bf)

    print("KERNEL_OK")
</pallas_src>

<mosaic_0001>
module attributes {stable_mosaic.version = 11 : i64} {
  func.func @_label_smoothing_kernel(%arg0: i32, %arg1: i32, %arg2: memref<16x512xf32, #tpu.memory_space<vmem>>, %arg3: memref<16x1xi32, #tpu.memory_space<vmem>>, %arg4: memref<16x1xf32, #tpu.memory_space<vmem>>, %arg5: memref<16x1xf32, #tpu.memory_space<vmem>>) attributes {dimension_semantics = [#tpu.dimension_semantics<parallel>, #tpu.dimension_semantics<arbitrary>], iteration_bounds = array<i64: 1, 1>, scalar_prefetch = 0 : i64, scratch_operands = 1 : i64, tpu.core_type = #tpu.core_type<tc>, window_params = [{transform_indices = @transform_0, window_bounds = array<i64: 16, 512>}, {transform_indices = @transform_1, window_bounds = array<i64: 16, 1>}, {transform_indices = @transform_2, window_bounds = array<i64: 16, 1>}]} {
    %c0_i32 = arith.constant 0 : i32
    %0 = arith.cmpi eq, %arg1, %c0_i32 : i32
    %1 = arith.extui %0 : i1 to i32
    %c0_i32_0 = arith.constant 0 : i32
    %2 = arith.cmpi ne, %1, %c0_i32_0 : i32
    scf.if %2 {
      %cst_14 = arith.constant 0.000000e+00 : f32
      %28 = vector.broadcast %cst_14 : f32 to vector<16x1xf32>
      %c0_15 = arith.constant 0 : index
      %c0_16 = arith.constant 0 : index
      %29 = vector.load %arg5[%c0_15, %c0_16] : memref<16x1xf32, #tpu.memory_space<vmem>>, vector<16x1xf32>
      tpu.vector_store %arg5[%c0_15, %c0_16], %28 {strides = array<i32>} : memref<16x1xf32, #tpu.memory_space<vmem>>, vector<16x1xf32>,
    } else {
    }
    %c0 = arith.constant 0 : index
    %c0_1 = arith.constant 0 : index
    %3 = vector.load %arg3[%c0, %c0_1] : memref<16x1xi32, #tpu.memory_space<vmem>>, vector<16x1xi32>
    %4 = tpu.iota {dimensions = array<i32: 1>} : vector<16x512xi32>
    %c512_i32 = arith.constant 512 : i32
    %5 = arith.muli %arg1, %c512_i32 : i32
    %6 = vector.broadcast %5 : i32 to vector<16x1xi32>
    %7 = arith.subi %3, %6 : vector<16x1xi32>
    %8 = vector.broadcast %7 : vector<16x1xi32> to vector<16x512xi32>
    %9 = arith.cmpi eq, %4, %8 : vector<16x512xi32>
    %c0_i32_2 = arith.constant 0 : i32
    %10 = arith.subi %c0_i32_2, %5 : i32
    %11 = vector.broadcast %10 : i32 to vector<16x512xi32>
    %12 = arith.cmpi eq, %4, %11 : vector<16x512xi32>
    %cst = arith.constant 0.899999976 : f32
    %cst_3 = arith.constant 1.96078428E-4 : f32
    %13 = vector.broadcast %cst : f32 to vector<16x512xf32>
    %14 = vector.broadcast %cst_3 : f32 to vector<16x512xf32>
    %15 = arith.select %9, %13, %14 : vector<16x512xi1>, vector<16x512xf32>
    %cst_4 = arith.constant 0.000000e+00 : f32
    %16 = vector.broadcast %cst_4 : f32 to vector<16x512xf32>
    %17 = arith.select %12, %16, %15 : vector<16x512xi1>, vector<16x512xf32>
    %c0_5 = arith.constant 0 : index
    %c0_6 = arith.constant 0 : index
    %18 = vector.load %arg5[%c0_5, %c0_6] : memref<16x1xf32, #tpu.memory_space<vmem>>, vector<16x1xf32>
    %c0_7 = arith.constant 0 : index
    %c0_8 = arith.constant 0 : index
    %19 = vector.load %arg2[%c0_7, %c0_8] : memref<16x512xf32, #tpu.memory_space<vmem>>, vector<16x512xf32>
    %20 = arith.mulf %17, %19 : vector<16x512xf32>
    %cst_9 = arith.constant dense<0.000000e+00> : vector<16xf32>
    %21 = vector.multi_reduction <add>, %20, %cst_9 [1] : vector<16x512xf32> to vector<16xf32>
    %22 = vector.shape_cast %21 : vector<16xf32> to vector<16x1xf32>
    %23 = arith.addf %18, %22 : vector<16x1xf32>
    %c0_10 = arith.constant 0 : index
    %c0_11 = arith.constant 0 : index
    %24 = vector.load %arg5[%c0_10, %c0_11] : memref<16x1xf32, #tpu.memory_space<vmem>>, vector<16x1xf32>
    tpu.vector_store %arg5[%c0_10, %c0_11], %23 {strides = array<i32>} : memref<16x1xf32, #tpu.memory_space<vmem>>, vector<16x1xf32>,
    %c0_i32_12 = arith.constant 0 : i32
    %25 = arith.cmpi eq, %arg1, %c0_i32_12 : i32
    %26 = arith.extui %25 : i1 to i32
    %c0_i32_13 = arith.constant 0 : i32
    %27 = arith.cmpi ne, %26, %c0_i32_13 : i32
    scf.if %27 {
      %c0_i32_14 = arith.constant 0 : i32
      %28 = vector.broadcast %c0_i32_14 : i32 to vector<16x1xi32>
      %29 = arith.cmpi ne, %3, %28 : vector<16x1xi32>
      %c0_15 = arith.constant 0 : index
      %c0_16 = arith.constant 0 : index
      %30 = vector.load %arg5[%c0_15, %c0_16] : memref<16x1xf32, #tpu.memory_space<vmem>>, vector<16x1xf32>
      %cst_17 = arith.constant -0.948524057 : f32
      %31 = vector.broadcast %cst_17 : f32 to vector<16x1xf32>
      %32 = arith.subf %30, %31 : vector<16x1xf32>
      %cst_18 = arith.constant 0.000000e+00 : f32
      %33 = vector.broadcast %cst_18 : f32 to vector<16x1xf32>
      %34 = arith.select %29, %32, %33 : vector<16x1xi1>, vector<16x1xf32>
      %c0_19 = arith.constant 0 : index
      %c0_20 = arith.constant 0 : index
      %35 = vector.load %arg4[%c0_19, %c0_20] : memref<16x1xf32, #tpu.memory_space<vmem>>, vector<16x1xf32>
      tpu.vector_store %arg4[%c0_19, %c0_20], %34 {strides = array<i32>} : memref<16x1xf32, #tpu.memory_space<vmem>>, vector<16x1xf32>,
    } else {
    }
    return
  }
  func.func @transform_0(%arg0: i32, %arg1: i32) -> (i32, i32) {
    %c0_i32 = arith.constant 0 : i32
    return %arg0, %arg1 : i32, i32
  }
  func.func @transform_1(%arg0: i32, %arg1: i32) -> (i32, i32) {
    %c0_i32 = arith.constant 0 : i32
    %c0_i32_0 = arith.constant 0 : i32
    return %arg0, %c0_i32 : i32, i32
  }
  func.func @transform_2(%arg0: i32, %arg1: i32) -> (i32, i32) {
    %c0_i32 = arith.constant 0 : i32
    %c0_i32_0 = arith.constant 0 : i32
    return %arg0, %c0_i32 : i32, i32
  }
}

</mosaic_0001>

<llo_original>
// kernel: tpu_custom_call.1
$region0: #{tpu_custom_call.1}
  #allocation0 [shape = 'u32[]', space=smem, size = 0x4, offset = 0x4, fixed_abs, tag = 'smem constant byte address 0x4 - core index']
  #allocation1 [shape = 'u32[144,128]{1,0:T(1,128)}', space=vmem, size = 0x12000, scoped, tag = 'internal scratch']
  #allocation2 [shape = 'f32[16,1]{1,0:T(8,128)}', space=vmem, size = 0x2000, scoped, tag = 'scratch operand']
  %s0 = inlined_call_operand.hbm [shape: f32[16,512], index: 0, kind: input, shape index: {}]
  %s1 = inlined_call_operand.vmem [shape: s32[16,1], index: 1, kind: input, shape index: {}]
  %s2 = inlined_call_operand.vmem [shape: f32[16,1], index: 2, kind: output, shape index: {}]
  %s3 = sld [smem:[#allocation0]]
  $region30: #{tpu_custom_call.1} parent=0
    _
  %s5 = ssub.s32 1, %s3
  %s6 = scalar_select 0, %s5, %s3
  $region1: #{tpu_custom_call.1} parent=0
    #allocation3 [shape = 'u8[32768]{0}', space=vmem, size = 0x8000, scoped, tag = 'input window, operand 0, single buffered']
    #allocation4 [shape = 's32[1]{0}', space=sflag, size = 0x4, scoped, tag = 'scoped memory for tpu_custom_call.1']
    %7 = vsyncpa [#allocation4], 0
    // Predicated region
    $region2: #{tpu_custom_call.1} parent=1 // pred_check
      _
    $region3: #{tpu_custom_call.1} parent=1 // pred_check_branch
      %9 = sbr.rel (0) target = $region5
    $region4: #{tpu_custom_call.1} parent=1 // pred_region
      %s11 = ssub.s32 1024, 1024
      %12 = vsyncadd [#allocation4], %s11
      %s13 = sshll.u32 [#allocation3], 4
      %s14 = int_to_ptr.vmem [resolvable:$true] %s13
      %19 = dma.hbm_to_vmem [thread:$0]  %s0, 1024, %s14, [#allocation4], 512, 512, 32
    $region5: #{tpu_custom_call.1} parent=1 // pred_fallthru
      _
    // Predicated region
    $region6: #{tpu_custom_call.1} parent=1 // pred_check
      _
    $region7: #{tpu_custom_call.1} parent=1 // pred_check_branch
      %21 = sbr.rel (0) target = $region9
    $region8: #{tpu_custom_call.1} parent=1 // pred_region
      _
    $region9: #{tpu_custom_call.1} parent=1 // pred_fallthru
      _
    // Predicated region
    $region10: #{tpu_custom_call.1} parent=1 // pred_check
      _
    $region11: #{tpu_custom_call.1} parent=1 // pred_check_branch
      %23 = sbr.rel (0) target = $region13
    $region12: #{tpu_custom_call.1} parent=1 // pred_region
      %24 = dma.done [#allocation4], 1024
    $region13: #{tpu_custom_call.1} parent=1 // pred_fallthru
      _
    %p25 = scmp.eq.s32.totalorder 0, 0
    // Predicated region
    $region14: #{tpu_custom_call.1} parent=1 // pred_check
      %p26 = pneg %p25
    $region15: #{tpu_custom_call.1} parent=1 // pred_check_branch
      %28 = sbr.rel (%p26) target = $region17
    $region16: #{tpu_custom_call.1} parent=1 // pred_region
      %vm29 = vcmask 7168
      %30 = vst.msk [vmem:[#allocation2] sm:$0xff] %vm29, 0.0
      %31 = vst.msk [vmem:[#allocation2 + $0x8] sm:$0xff] %vm29, 0.0
    $region17: #{tpu_custom_call.1} parent=1 // pred_fallthru
      _
    %v32 = vld [vmem:[%s1] sm:$0xff]
    %v33 = vld [vmem:[%s1 + $0x8] sm:$0xff]
    %v34 = vlaneseq
    %v35 = vand.u32 %v34, 127
    %v36 = vadd.s32 %v35, 128
    %v37 = vadd.s32 %v35, 256
    %v38 = vadd.s32 %v35, 384
    %s39 = smul.u32 0, 512
    %v40 = vstv %s39
    %v41 = vsub.s32 %v32, %v40
    %v42 = vsub.s32 %v33, %v40
    %43 = vset.pattern.permute.xlu0 0
    %44 = vperm.xlu0 %43, %v41
    %v45 = vpop.permute.xlu0 %44
    %46 = vset.pattern.permute.xlu0 0
    %47 = vperm.xlu0 %46, %v42
    %v48 = vpop.permute.xlu0 %47
    %vm49 = vcmp.eq.s32.totalorder %v35, %v45
    %vm50 = vcmp.eq.s32.totalorder %v36, %v45
    %vm51 = vcmp.eq.s32.totalorder %v37, %v45
    %vm52 = vcmp.eq.s32.totalorder %v38, %v45
    %vm53 = vcmp.eq.s32.totalorder %v35, %v48
    %vm54 = vcmp.eq.s32.totalorder %v36, %v48
    %vm55 = vcmp.eq.s32.totalorder %v37, %v48
    %vm56 = vcmp.eq.s32.totalorder %v38, %v48
    %s57 = ssub.s32 0, %s39
    %v58 = vstv %s57
    %vm59 = vcmp.eq.s32.totalorder %v35, %v58
    %vm60 = vcmp.eq.s32.totalorder %v36, %v58
    %vm61 = vcmp.eq.s32.totalorder %v37, %v58
    %vm62 = vcmp.eq.s32.totalorder %v38, %v58
    %v63 = vsel %vm49, 0.9, 0.00019607843
    %v64 = vsel %vm50, 0.9, 0.00019607843
    %v65 = vsel %vm51, 0.9, 0.00019607843
    %v66 = vsel %vm52, 0.9, 0.00019607843
    %v67 = vsel %vm53, 0.9, 0.00019607843
    %v68 = vsel %vm54, 0.9, 0.00019607843
    %v69 = vsel %vm55, 0.9, 0.00019607843
    %v70 = vsel %vm56, 0.9, 0.00019607843
    %v71 = vsel %vm59, 0.0, %v63
    %v72 = vsel %vm60, 0.0, %v64
    %v73 = vsel %vm61, 0.0, %v65
    %v74 = vsel %vm62, 0.0, %v66
    %v75 = vsel %vm59, 0.0, %v67
    %v76 = vsel %vm60, 0.0, %v68
    %v77 = vsel %vm61, 0.0, %v69
    %v78 = vsel %vm62, 0.0, %v70
    %v79 = vld [vmem:[#allocation2] sm:$0xff]
    %v80 = vld [vmem:[#allocation2 + $0x8] sm:$0xff]
    %v81 = vld [vmem:[#allocation3] sm:$0xff]
    %v82 = vld [vmem:[#allocation3 + $0x8] sm:$0xff]
    %v83 = vld [vmem:[#allocation3 + $0x10] sm:$0xff]
    %v84 = vld [vmem:[#allocation3 + $0x18] sm:$0xff]
    %v85 = vld [vmem:[#allocation3 + $0x20] sm:$0xff]
    %v86 = vld [vmem:[#allocation3 + $0x28] sm:$0xff]
    %v87 = vld [vmem:[#allocation3 + $0x30] sm:$0xff]
    %v88 = vld [vmem:[#allocation3 + $0x38] sm:$0xff]
    %v89 = vmul.f32 %v71, %v81
    %v90 = vmul.f32 %v72, %v82
    %v91 = vmul.f32 %v73, %v83
    %v92 = vmul.f32 %v74, %v84
    %v93 = vmul.f32 %v75, %v85
    %v94 = vmul.f32 %v76, %v86
    %v95 = vmul.f32 %v77, %v87
    %v96 = vmul.f32 %v78, %v88
    %v97 = vadd.f32 %v89, %v90
    %v98 = vadd.f32 %v97, %v91
    %v99 = vadd.f32 %v98, %v92
    %100 = vadd.xlane.f32.xlu0 %v99
    %v101 = vpop.xlane.xlu0 %100
    %v102 = vadd.f32 %v93, %v94
    %v103 = vadd.f32 %v102, %v95
    %v104 = vadd.f32 %v103, %v96
    %105 = vadd.xlane.f32.xlu0 %v104
    %v106 = vpop.xlane.xlu0 %105
    %v107 = vadd.f32 %v79, %v101
    %v108 = vadd.f32 %v80, %v106
    %vm109 = vcmask 7168
    %110 = vst.msk [vmem:[#allocation2] sm:$0xff] %vm109, %v107
    %111 = vst.msk [vmem:[#allocation2 + $0x8] sm:$0xff] %vm109, %v108
    // Predicated region
    $region18: #{tpu_custom_call.1} parent=1 // pred_check
      %p112 = pneg %p25
    $region19: #{tpu_custom_call.1} parent=1 // pred_check_branch
      %114 = sbr.rel (%p112) target = $region21
    $region20: #{tpu_custom_call.1} parent=1 // pred_region
      %vm115 = vcmp.ne.s32.totalorder %v32, 0
      %vm116 = vcmp.ne.s32.totalorder %v33, 0
      %v117 = vld [vmem:[#allocation2] sm:$0xff]
      %v118 = vld [vmem:[#allocation2 + $0x8] sm:$0xff]
      %v119 = vsub.f32 %v117, -0.94852406
      %v120 = vsub.f32 %v118, -0.94852406
      %v121 = vsel %vm115, %v119, 0.0
      %v122 = vsel %vm116, %v120, 0.0
      %123 = vst.msk [vmem:[%s2] sm:$0xff] %vm109, %v121
      %124 = vst.msk [vmem:[%s2 + $0x8] sm:$0xff] %vm109, %v122
    $region21: #{tpu_custom_call.1} parent=1 // pred_fallthru
      _
    // Predicated region
    $region22: #{tpu_custom_call.1} parent=1 // pred_check
      _
    $region23: #{tpu_custom_call.1} parent=1 // pred_check_branch
      %126 = sbr.rel (0) target = $region25
    $region24: #{tpu_custom_call.1} parent=1 // pred_region
      _
    $region25: #{tpu_custom_call.1} parent=1 // pred_fallthru
      _
    // Predicated region
    $region26: #{tpu_custom_call.1} parent=1 // pred_check
      _
    $region27: #{tpu_custom_call.1} parent=1 // pred_check_branch
      %128 = sbr.rel (0) target = $region29
    $region28: #{tpu_custom_call.1} parent=1 // pred_region
      _
    $region29: #{tpu_custom_call.1} parent=1 // pred_fallthru
      _
    %129 = vsyncpa [#allocation4], 1

</llo_original>
